<compile_context>
chip_gen: v5e
topology: v5e:2x2
jax: 0.10.0
libtpu: 0.0.40
codegen_flags: <defaults>
</compile_context>

<pallas_src>
import functools
import math

import jax
import jax.numpy as jnp
from jax.experimental import pallas as pl
from jax.experimental.pallas import tpu as pltpu


# --------------------------------------------------------------------------
# Kernels
# --------------------------------------------------------------------------
def _pe_add_kernel(x_ref, pe_ref, o_ref):
    # (TS, B, E) + (TS, 1, E) -> (TS, B, E)   pure mem-bound VPU add
    o_ref[...] = (x_ref[...] + pe_ref[...]).astype(o_ref.dtype)


def _pe_add_dropout_kernel(x_ref, pe_ref, bits_ref, o_ref, *, p):
    # add with broadcast over batch, then inverted dropout from uint32 bits
    y = x_ref[...] + pe_ref[...]                       # (TS, B, E)
    threshold = jnp.uint32(min(int(p * (2 ** 32)), 2 ** 32 - 1))
    keep = bits_ref[...] >= threshold                  # drop iff u32 < p*2^32
    scale = jnp.asarray(1.0 / (1.0 - p), y.dtype)
    y = jnp.where(keep, y * scale, jnp.zeros_like(y))
    o_ref[...] = y.astype(o_ref.dtype)


# --------------------------------------------------------------------------
# Buffer construction (identical to the PyTorch __init__ computation)
# --------------------------------------------------------------------------
def build_pos_embedding(emb_size: int, maxlen: int = 128) -> jnp.ndarray:
    den = jnp.exp(-jnp.arange(0, emb_size, 2, dtype=jnp.float32)
                  * math.log(10000.0) / emb_size)                    # (E/2,)
    pos = jnp.arange(0, maxlen, dtype=jnp.float32).reshape(maxlen, 1)
    pe = jnp.zeros((maxlen, emb_size), dtype=jnp.float32)
    pe = pe.at[:, 0::2].set(jnp.sin(pos * den))
    pe = pe.at[:, 1::2].set(jnp.cos(pos * den))
    return pe[:, None, :]                                            # (maxlen,1,E)


# --------------------------------------------------------------------------
# Wrapper
# --------------------------------------------------------------------------
def _pick_tile_seq(S: int, B: int, E: int, itemsize: int,
                   target_bytes: int = 1 << 20) -> int:
    """Seq-tile so one (TS,B,E) block is ~1 MiB (measured mem-bound sweet spot,
    and small enough to double-buffer comfortably inside v7x's 64 MiB VMEM)."""
    rows = max(1, target_bytes // max(1, B * E * itemsize))
    ts = min(S, rows)
    if ts >= 8:
        ts -= ts % 8          # keep tile starts nicely aligned
    return max(1, ts)


def positional_encoding_forward(token_embedding: jnp.ndarray,
                                pos_embedding: jnp.ndarray,
                                p: float,
                                training: bool,
                                rng_key=None) -> jnp.ndarray:
    S, B, E = token_embedding.shape
    maxlen = pos_embedding.shape[0]
    assert S <= maxlen, f"sequence length {S} exceeds maxlen {maxlen}"
    dtype = token_embedding.dtype

    apply_dropout = bool(training) and float(p) > 0.0
    if apply_dropout and float(p) >= 1.0:
        # PyTorch nn.Dropout(p=1.0) drops everything in training mode.
        return jnp.zeros_like(token_embedding)

    TS = _pick_tile_seq(S, B, E, jnp.dtype(dtype).itemsize)
    grid = (pl.cdiv(S, TS),)

    x_spec = pl.BlockSpec((TS, B, E), lambda i: (i, 0, 0))
    pe_spec = pl.BlockSpec((TS, 1, E), lambda i: (i, 0, 0))   # indexes full buffer
    out_spec = pl.BlockSpec((TS, B, E), lambda i: (i, 0, 0))

    if apply_dropout:
        if rng_key is None:
            rng_key = jax.random.PRNGKey(0)
        # TODO(synk): on real TPU the in-kernel pltpu.prng_* path would avoid
        # this extra uint32 stream, but it does not lower under interpret mode.
        bits = jax.random.bits(rng_key, (S, B, E), dtype=jnp.uint32)
        kernel = functools.partial(_pe_add_dropout_kernel, p=float(p))
        in_specs = [x_spec, pe_spec,
                    pl.BlockSpec((TS, B, E), lambda i: (i, 0, 0))]
        args = (token_embedding, pos_embedding, bits)
    else:
        kernel = _pe_add_kernel
        in_specs = [x_spec, pe_spec]
        args = (token_embedding, pos_embedding)

    return pl.pallas_call(
        kernel,
        out_shape=jax.ShapeDtypeStruct((S, B, E), dtype),
        grid_spec=pl.GridSpec(grid=grid, in_specs=in_specs, out_specs=out_spec),
        compiler_params=pltpu.CompilerParams(
            dimension_semantics=("parallel",)),   # v7x: shard seq tiles across TCs
    )(*args)


# --------------------------------------------------------------------------
# Demo / self-check
# --------------------------------------------------------------------------
if __name__ == "__main__":
    S, B, E = 8, 2, 32
    MAXLEN = 128
    DROPOUT_P = 0.1

    key = jax.random.PRNGKey(0)
    x = jax.random.normal(key, (S, B, E), dtype=jnp.float32)
    pos_embedding = build_pos_embedding(E, MAXLEN)
    ref = x + pos_embedding[:S]                      # pure-JAX reference

    # Eval-mode forward (dropout is identity).
    out_eval = positional_encoding_forward(x, pos_embedding, DROPOUT_P,
                                           training=False)
    out_eval = jax.block_until_ready(out_eval)
    assert out_eval.shape == (S, B, E)
    assert jnp.allclose(out_eval, ref, atol=1e-6), "eval-mode mismatch vs reference"

    # Train-mode forward (inverted dropout).
    out_train = positional_encoding_forward(x, pos_embedding, DROPOUT_P,
                                            training=True,
                                            rng_key=jax.random.PRNGKey(42))
    out_train = jax.block_until_ready(out_train)
    assert out_train.shape == (S, B, E)
    assert bool(jnp.all(jnp.isfinite(out_train)))
    # Each element is either dropped (0) or scaled by 1/(1-p).
    ref_scaled = ref / (1.0 - DROPOUT_P)
    ok = jnp.isclose(out_train, ref_scaled, atol=1e-5) | jnp.isclose(out_train, 0.0, atol=1e-7)
    assert bool(jnp.all(ok)), "train-mode values are neither dropped nor correctly scaled"
    # Dropout should actually drop roughly p of the elements (loose sanity bound).
    drop_frac = float(jnp.mean(jnp.isclose(out_train, 0.0, atol=1e-7)))
    assert drop_frac < 0.6, f"dropout dropped too much: {drop_frac}"

    print("KERNEL_OK")
</pallas_src>

<mosaic_0001>
module attributes {stable_mosaic.version = 11 : i64} {
  func.func @_pe_add_kernel(%arg0: i32, %arg1: memref<8x2x32xf32, #tpu.memory_space<vmem>>, %arg2: memref<8x1x32xf32, #tpu.memory_space<vmem>>, %arg3: memref<8x2x32xf32, #tpu.memory_space<vmem>>) attributes {dimension_semantics = [#tpu.dimension_semantics<parallel>], iteration_bounds = array<i64: 1>, scalar_prefetch = 0 : i64, scratch_operands = 0 : i64, tpu.core_type = #tpu.core_type<tc>, window_params = [{transform_indices = @transform_0, window_bounds = array<i64: 8, 2, 32>}, {transform_indices = @transform_1, window_bounds = array<i64: 8, 1, 32>}, {transform_indices = @transform_2, window_bounds = array<i64: 8, 2, 32>}]} {
    %c0 = arith.constant 0 : index
    %c0_0 = arith.constant 0 : index
    %c0_1 = arith.constant 0 : index
    %0 = vector.load %arg1[%c0, %c0_0, %c0_1] : memref<8x2x32xf32, #tpu.memory_space<vmem>>, vector<8x2x32xf32>
    %c0_2 = arith.constant 0 : index
    %c0_3 = arith.constant 0 : index
    %c0_4 = arith.constant 0 : index
    %1 = vector.load %arg2[%c0_2, %c0_3, %c0_4] : memref<8x1x32xf32, #tpu.memory_space<vmem>>, vector<8x1x32xf32>
    %2 = vector.broadcast %1 : vector<8x1x32xf32> to vector<8x2x32xf32>
    %3 = arith.addf %0, %2 : vector<8x2x32xf32>
    %c0_5 = arith.constant 0 : index
    %c0_6 = arith.constant 0 : index
    %c0_7 = arith.constant 0 : index
    %4 = vector.load %arg3[%c0_5, %c0_6, %c0_7] : memref<8x2x32xf32, #tpu.memory_space<vmem>>, vector<8x2x32xf32>
    tpu.vector_store %arg3[%c0_5, %c0_6, %c0_7], %3 {strides = array<i32>} : memref<8x2x32xf32, #tpu.memory_space<vmem>>, vector<8x2x32xf32>,
    return
  }
  func.func @transform_0(%arg0: i32) -> (i32, i32, i32) {
    %c0_i32 = arith.constant 0 : i32
    %c0_i32_0 = arith.constant 0 : i32
    %c0_i32_1 = arith.constant 0 : i32
    return %arg0, %c0_i32, %c0_i32_0 : i32, i32, i32
  }
  func.func @transform_1(%arg0: i32) -> (i32, i32, i32) {
    %c0_i32 = arith.constant 0 : i32
    %c0_i32_0 = arith.constant 0 : i32
    %c0_i32_1 = arith.constant 0 : i32
    return %arg0, %c0_i32, %c0_i32_0 : i32, i32, i32
  }
  func.func @transform_2(%arg0: i32) -> (i32, i32, i32) {
    %c0_i32 = arith.constant 0 : i32
    %c0_i32_0 = arith.constant 0 : i32
    %c0_i32_1 = arith.constant 0 : i32
    return %arg0, %c0_i32, %c0_i32_0 : i32, i32, i32
  }
}

</mosaic_0001>

<llo_original>
// kernel: tpu_custom_call.1
$region0: #{tpu_custom_call.1}
  #allocation0 [shape = 'u32[]', space=smem, size = 0x4, offset = 0x4, fixed_abs, tag = 'smem constant byte address 0x4 - core index']
  #allocation1 [shape = 'u32[72,128]{1,0:T(1,128)}', space=vmem, size = 0x9000, scoped, tag = 'internal scratch']
  %s0 = inlined_call_operand.vmem [shape: f32[8,2,32], index: 0, kind: input, shape index: {}]
  %s1 = inlined_call_operand.vmem [shape: f32[128,1,32], index: 1, kind: input, shape index: {}]
  %s2 = inlined_call_operand.hbm [shape: f32[8,2,32], index: 2, kind: output, shape index: {}]
  %s3 = sld [smem:[#allocation0]]
  $region18: #{tpu_custom_call.1} parent=0
    _
  %s5 = ssub.s32 1, %s3
  %s6 = scalar_select 0, %s5, %s3
  $region1: #{tpu_custom_call.1} parent=0
    #allocation2 [shape = 'u8[8192]{0}', space=vmem, size = 0x2000, scoped, tag = 'output window, operand 0, single buffered']
    #allocation3 [shape = 's32[1]{0}', space=sflag, size = 0x4, scoped, tag = 'scoped memory for tpu_custom_call.1']
    %7 = vsyncpa [#allocation3], 0
    // Predicated region
    $region2: #{tpu_custom_call.1} parent=1 // pred_check
      _
    $region3: #{tpu_custom_call.1} parent=1 // pred_check_branch
      %9 = sbr.rel (0) target = $region5
    $region4: #{tpu_custom_call.1} parent=1 // pred_region
      _
    $region5: #{tpu_custom_call.1} parent=1 // pred_fallthru
      _
    // Predicated region
    $region6: #{tpu_custom_call.1} parent=1 // pred_check
      _
    $region7: #{tpu_custom_call.1} parent=1 // pred_check_branch
      %11 = sbr.rel (0) target = $region9
    $region8: #{tpu_custom_call.1} parent=1 // pred_region
      _
    $region9: #{tpu_custom_call.1} parent=1 // pred_fallthru
      _
    %v12 = vld [vmem:[%s0] sm:$0x3]
    %v13 = vld [vmem:[%s0 + $0x2] sm:$0x3]
    %v14 = vld [vmem:[%s0 + $0x4] sm:$0x3]
    %v15 = vld [vmem:[%s0 + $0x6] sm:$0x3]
    %v16 = vld [vmem:[%s0 + $0x8] sm:$0x3]
    %v17 = vld [vmem:[%s0 + $0xa] sm:$0x3]
    %v18 = vld [vmem:[%s0 + $0xc] sm:$0x3]
    %v19 = vld [vmem:[%s0 + $0xe] sm:$0x3]
    %v20 = vld [vmem:[%s1] sm:$0x1]
    %v21 = vld [vmem:[%s1 + $0x1] sm:$0x1]
    %v22 = vld [vmem:[%s1 + $0x2] sm:$0x1]
    %v23 = vld [vmem:[%s1 + $0x3] sm:$0x1]
    %v24 = vld [vmem:[%s1 + $0x4] sm:$0x1]
    %v25 = vld [vmem:[%s1 + $0x5] sm:$0x1]
    %v26 = vld [vmem:[%s1 + $0x6] sm:$0x1]
    %v27 = vld [vmem:[%s1 + $0x7] sm:$0x1]
    %v36 = vperm.slane %v20, 0
    %v37 = vperm.slane %v21, 0
    %v38 = vperm.slane %v22, 0
    %v39 = vperm.slane %v23, 0
    %v40 = vperm.slane %v24, 0
    %v41 = vperm.slane %v25, 0
    %v42 = vperm.slane %v26, 0
    %v43 = vperm.slane %v27, 0
    %v52 = vadd.f32 %v12, %v36
    %v53 = vadd.f32 %v13, %v37
    %v54 = vadd.f32 %v14, %v38
    %v55 = vadd.f32 %v15, %v39
    %v56 = vadd.f32 %v16, %v40
    %v57 = vadd.f32 %v17, %v41
    %v58 = vadd.f32 %v18, %v42
    %v59 = vadd.f32 %v19, %v43
    %vm60 = vcmask 254976
    %61 = vst.msk [vmem:[#allocation2] sm:$0x3] %vm60, %v52
    %62 = vst.msk [vmem:[#allocation2 + $0x2] sm:$0x3] %vm60, %v53
    %63 = vst.msk [vmem:[#allocation2 + $0x4] sm:$0x3] %vm60, %v54
    %64 = vst.msk [vmem:[#allocation2 + $0x6] sm:$0x3] %vm60, %v55
    %65 = vst.msk [vmem:[#allocation2 + $0x8] sm:$0x3] %vm60, %v56
    %66 = vst.msk [vmem:[#allocation2 + $0xa] sm:$0x3] %vm60, %v57
    %67 = vst.msk [vmem:[#allocation2 + $0xc] sm:$0x3] %vm60, %v58
    %68 = vst.msk [vmem:[#allocation2 + $0xe] sm:$0x3] %vm60, %v59
    // Predicated region
    $region10: #{tpu_custom_call.1} parent=1 // pred_check
      _
    $region11: #{tpu_custom_call.1} parent=1 // pred_check_branch
      %70 = sbr.rel (0) target = $region13
    $region12: #{tpu_custom_call.1} parent=1 // pred_region
      %72 = vsyncadd [#allocation3], 0
      %s73 = sshll.u32 [#allocation2], 4
      %s74 = int_to_ptr.vmem [resolvable:$true] %s73
      %s75 = sshll.u32 %s2, 4
      %s76 = int_to_ptr.hbm [resolvable:$true] %s75
      %81 = dma.vmem_to_hbm [thread:$0]  %s74, 256, %s76, [#allocation3], 32, 32, 2
    $region13: #{tpu_custom_call.1} parent=1 // pred_fallthru
      _
    // Predicated region
    $region14: #{tpu_custom_call.1} parent=1 // pred_check
      _
    $region15: #{tpu_custom_call.1} parent=1 // pred_check_branch
      %83 = sbr.rel (0) target = $region17
    $region16: #{tpu_custom_call.1} parent=1 // pred_region
      %85 = dma.done [#allocation3], 256
    $region17: #{tpu_custom_call.1} parent=1 // pred_fallthru
      _
    %86 = vsyncpa [#allocation3], 1

</llo_original>
